<compile_context>
chip_gen: v5e
topology: v5e:2x2
jax: 0.10.0
libtpu: 0.0.40
codegen_flags: <defaults>
</compile_context>

<pallas_src>
import jax
import jax.numpy as jnp
from jax import lax
from jax.experimental import pallas as pl
from jax.experimental.pallas import tpu as pltpu


def _normalize_rows_kernel(x_ref, o_ref):
    """Block = (TR, N) rows of the (2B, H*W) view.

    Even rows (channel 0): sigmoid.  Odd rows (channel 1): softmax over the
    lane (H*W) axis.  Both are computed for every row (mem-bound kernel,
    compute is free) and selected per-row with a sublane-parity mask.
    """
    tr, _ = x_ref.shape
    x = x_ref[...].astype(jnp.float32)

    # channel 0 path: elementwise sigmoid (VPU/EUP)
    sig = jax.nn.sigmoid(x)

    # channel 1 path: numerically stable softmax over the lane axis
    m = jnp.max(x, axis=-1, keepdims=True)            # XLU lane reduce
    e = jnp.exp(x - m)                                 # EUP
    denom = jnp.sum(e, axis=-1, keepdims=True)
    sm = e / denom                                     # exact divide (HBM-bound)

    # Row parity selects the channel: row r = 2*b + c, and block starts are
    # even (TR is even), so local parity == channel index.
    row = lax.broadcasted_iota(jnp.int32, (tr, 1), 0)
    is_c0 = (row % 2) == 0
    o_ref[...] = jnp.where(is_c0, sig, sm).astype(o_ref.dtype)


def _vmem_capacity_bytes() -> int:
    """Per-core VMEM capacity; conservative (v7x-sized) fallback."""
    try:
        info = pltpu.get_tpu_info()
        cap = getattr(info, "vmem_capacity_bytes", None)
        if cap:
            return int(cap)
    except Exception:
        pass
    return 64 << 20


def normalize_decoder_output(x_dec, *, rows_per_block=None):
    """Equivalent of BaseModel._normalize_decoder_output.

    x_dec: (B, 2, H, W) -> (B, 2, H, W); channel 0 sigmoid, channel 1 softmax
    over the flattened H*W plane.
    """
    B, C, H, W = x_dec.shape
    if C != 2:
        raise ValueError("decoder output must have exactly 2 channels")
    N = H * W
    R = B * C  # row r = 2*b + c  (even rows: channel 0, odd rows: channel 1)

    # Contiguous reshape (free): lane-dense rows, no channel dim in the block.
    x_rows = x_dec.reshape(R, N)

    itemsize = jnp.dtype(x_dec.dtype).itemsize
    row_bytes = N * itemsize
    vmem_cap = _vmem_capacity_bytes()

    if rows_per_block is None:
        # ~1/16 of VMEM per block -> in+out double-buffered uses ~1/4 of VMEM.
        target_block_bytes = max(1 << 20, vmem_cap // 16)
        rows_per_block = max(8, (target_block_bytes // max(row_bytes, 1)) // 8 * 8)
    else:
        assert rows_per_block % 8 == 0, "rows_per_block must be a multiple of 8"

    if R <= rows_per_block:
        TR = R  # tiny-problem fast path: whole array as a single block
    else:
        TR = rows_per_block
    assert TR % 2 == 0, "parity-based channel selection needs even block starts"
    grid = pl.cdiv(R, TR)  # ragged last block OK: rows are independent

    block_bytes = TR * row_bytes
    vmem_limit = int(min(max(4 * block_bytes + (2 << 20), 16 << 20),
                         (vmem_cap * 3) // 4))

    cost = pl.CostEstimate(
        flops=5 * R * N,                    # sub, max, add, div, select (rough)
        transcendentals=R * N,              # exp / sigmoid per element
        bytes_accessed=2 * R * N * itemsize,
    )

    out_rows = pl.pallas_call(
        _normalize_rows_kernel,
        out_shape=jax.ShapeDtypeStruct((R, N), x_dec.dtype),
        grid=(grid,),
        in_specs=[pl.BlockSpec((TR, N), lambda i: (i, 0))],
        out_specs=pl.BlockSpec((TR, N), lambda i: (i, 0)),
        compiler_params=pltpu.CompilerParams(
            dimension_semantics=("parallel",),
            vmem_limit_bytes=vmem_limit,
        ),
        cost_estimate=cost,
    )(x_rows)

    return out_rows.reshape(B, C, H, W)


def base_model_forward(x):
    """Equivalent of BaseModel.forward: returns a dict of GP outputs.

    TODO(synk): _create_gp_models / _do_gp_anticipation are abstract in the
    reference module, so the anticipation step is taken to be the
    decoder-output normalization applied to x itself.
    """
    occ = normalize_decoder_output(x)
    return {"occ_estimate": occ}


if __name__ == "__main__":
    key = jax.random.PRNGKey(0)

    # Primary: batch=2, channels=2 (ch0 sigmoid, ch1 softmax), 16x16 spatial.
    B, C, H, W = 2, 2, 16, 16
    x = jax.random.normal(key, (B, C, H, W), dtype=jnp.float32)

    out = base_model_forward(x)
    occ = jax.block_until_ready(out["occ_estimate"])

    ref_c0 = jax.nn.sigmoid(x[:, 0])
    ref_c1 = jax.nn.softmax(x[:, 1].reshape(B, H * W), axis=1).reshape(B, H, W)

    assert occ.shape == (B, C, H, W)
    assert jnp.allclose(occ[:, 0], ref_c0, atol=2e-6, rtol=1e-5)
    assert jnp.allclose(occ[:, 1], ref_c1, atol=2e-6, rtol=1e-4)
    assert jnp.allclose(occ[:, 1].reshape(B, -1).sum(axis=1), 1.0, atol=1e-5)

    # Secondary: multi-block grid with a ragged last block (B*2 = 18 rows,
    # 8-row blocks -> grid of 3; OOB rows in the last block are independent
    # and their stores are discarded).
    key2 = jax.random.PRNGKey(1)
    B2, H2, W2 = 9, 16, 16
    x2 = jax.random.normal(key2, (B2, 2, H2, W2), dtype=jnp.float32)
    occ2 = jax.block_until_ready(normalize_decoder_output(x2, rows_per_block=8))
    ref2_c0 = jax.nn.sigmoid(x2[:, 0])
    ref2_c1 = jax.nn.softmax(
        x2[:, 1].reshape(B2, H2 * W2), axis=1).reshape(B2, H2, W2)
    assert occ2.shape == (B2, 2, H2, W2)
    assert jnp.allclose(occ2[:, 0], ref2_c0, atol=2e-6, rtol=1e-5)
    assert jnp.allclose(occ2[:, 1], ref2_c1, atol=2e-6, rtol=1e-4)

    print("KERNEL_OK")
</pallas_src>

<mosaic_0001>
module attributes {stable_mosaic.version = 11 : i64} {
  func.func @_normalize_rows_kernel(%arg0: i32, %arg1: memref<4x256xf32, #tpu.memory_space<vmem>>, %arg2: memref<4x256xf32, #tpu.memory_space<vmem>>) attributes {dimension_semantics = [#tpu.dimension_semantics<parallel>], iteration_bounds = array<i64: 1>, scalar_prefetch = 0 : i64, scratch_operands = 0 : i64, tpu.core_type = #tpu.core_type<tc>, window_params = [{transform_indices = @transform_0, window_bounds = array<i64: 4, 256>}, {transform_indices = @transform_1, window_bounds = array<i64: 4, 256>}]} {
    %c0 = arith.constant 0 : index
    %c0_0 = arith.constant 0 : index
    %0 = vector.load %arg1[%c0, %c0_0] : memref<4x256xf32, #tpu.memory_space<vmem>>, vector<4x256xf32>
    %1 = arith.negf %0 : vector<4x256xf32>
    %2 = math.exp %1 : vector<4x256xf32>
    %cst = arith.constant 1.000000e+00 : f32
    %3 = vector.broadcast %cst : f32 to vector<4x256xf32>
    %4 = arith.addf %3, %2 : vector<4x256xf32>
    %5 = arith.divf %3, %4 : vector<4x256xf32>
    %cst_1 = arith.constant dense<0xFF800000> : vector<4xf32>
    %6 = vector.multi_reduction <maximumf>, %0, %cst_1 [1] : vector<4x256xf32> to vector<4xf32>
    %7 = vector.shape_cast %6 : vector<4xf32> to vector<4x1xf32>
    %8 = vector.broadcast %7 : vector<4x1xf32> to vector<4x256xf32>
    %9 = arith.subf %0, %8 : vector<4x256xf32>
    %10 = math.exp %9 : vector<4x256xf32>
    %cst_2 = arith.constant dense<0.000000e+00> : vector<4xf32>
    %11 = vector.multi_reduction <add>, %10, %cst_2 [1] : vector<4x256xf32> to vector<4xf32>
    %12 = vector.shape_cast %11 : vector<4xf32> to vector<4x1xf32>
    %13 = vector.broadcast %12 : vector<4x1xf32> to vector<4x256xf32>
    %14 = arith.divf %10, %13 : vector<4x256xf32>
    %15 = tpu.iota {dimensions = array<i32: 0>} : vector<4x1xi32>
    %c2_i32 = arith.constant 2 : i32
    %c0_i32 = arith.constant 0 : i32
    %16 = arith.cmpi eq, %c2_i32, %c0_i32 : i32
    %c1_i32 = arith.constant 1 : i32
    %17 = arith.select %16, %c1_i32, %c2_i32 : i32
    %18 = vector.broadcast %17 : i32 to vector<4x1xi32>
    %19 = arith.remsi %15, %18 : vector<4x1xi32>
    %c0_i32_3 = arith.constant 0 : i32
    %20 = vector.broadcast %c0_i32_3 : i32 to vector<4x1xi32>
    %21 = arith.cmpi ne, %19, %20 : vector<4x1xi32>
    %c0_i32_4 = arith.constant 0 : i32
    %22 = vector.broadcast %c0_i32_4 : i32 to vector<4x1xi32>
    %23 = arith.cmpi slt, %19, %22 : vector<4x1xi32>
    %c0_i32_5 = arith.constant 0 : i32
    %24 = arith.cmpi slt, %17, %c0_i32_5 : i32
    %25 = vector.broadcast %24 : i1 to vector<4x1xi1>
    %26 = vector.broadcast %25 : vector<4x1xi1> to vector<4x1xi1>
    %27 = arith.xori %23, %26 : vector<4x1xi1>
    %28 = arith.andi %27, %21 : vector<4x1xi1>
    %29 = vector.broadcast %17 : i32 to vector<4x1xi32>
    %30 = arith.addi %19, %29 : vector<4x1xi32>
    %31 = arith.select %28, %30, %19 : vector<4x1xi1>, vector<4x1xi32>
    %c0_i32_6 = arith.constant 0 : i32
    %32 = vector.broadcast %c0_i32_6 : i32 to vector<4x1xi32>
    %33 = arith.cmpi eq, %31, %32 : vector<4x1xi32>
    %34 = vector.shape_cast %33 : vector<4x1xi1> to vector<4x1xi1>
    %35 = vector.broadcast %34 : vector<4x1xi1> to vector<4x256xi1>
    %36 = arith.select %35, %5, %14 : vector<4x256xi1>, vector<4x256xf32>
    %c0_7 = arith.constant 0 : index
    %c0_8 = arith.constant 0 : index
    %37 = vector.load %arg2[%c0_7, %c0_8] : memref<4x256xf32, #tpu.memory_space<vmem>>, vector<4x256xf32>
    tpu.vector_store %arg2[%c0_7, %c0_8], %36 {strides = array<i32>} : memref<4x256xf32, #tpu.memory_space<vmem>>, vector<4x256xf32>,
    return
  }
  func.func @transform_0(%arg0: i32) -> (i32, i32) {
    %c0_i32 = arith.constant 0 : i32
    %c0_i32_0 = arith.constant 0 : i32
    return %arg0, %c0_i32 : i32, i32
  }
  func.func @transform_1(%arg0: i32) -> (i32, i32) {
    %c0_i32 = arith.constant 0 : i32
    %c0_i32_0 = arith.constant 0 : i32
    return %arg0, %c0_i32 : i32, i32
  }
}

</mosaic_0001>

<llo_original>
// kernel: tpu_custom_call.1
$region0: #{tpu_custom_call.1}
  #allocation0 [shape = 'u32[]', space=smem, size = 0x4, offset = 0x4, fixed_abs, tag = 'smem constant byte address 0x4 - core index']
  #allocation1 [shape = 'u32[72,128]{1,0:T(1,128)}', space=vmem, size = 0x9000, scoped, tag = 'internal scratch']
  %s0 = inlined_call_operand.hbm [shape: f32[4,256], index: 0, kind: input, shape index: {}]
  %s1 = inlined_call_operand.hbm [shape: f32[4,256], index: 1, kind: output, shape index: {}]
  %s2 = sld [smem:[#allocation0]]
  $region18: #{tpu_custom_call.1} parent=0
    _
  %s4 = ssub.s32 1, %s2
  %s5 = scalar_select 0, %s4, %s2
  $region1: #{tpu_custom_call.1} parent=0
    #allocation2 [shape = 'u8[4096]{0}', space=vmem, size = 0x1000, scoped, tag = 'input window, operand 0, single buffered']
    #allocation3 [shape = 's32[1]{0}', space=sflag, size = 0x4, scoped, tag = 'scoped memory for tpu_custom_call.1']
    #allocation4 [shape = 's32[1]{0}', space=sflag, size = 0x4, scoped, tag = 'scoped memory for tpu_custom_call.1']
    #allocation5 [shape = 'u8[4096]{0}', space=vmem, size = 0x1000, scoped, tag = 'output window, operand 0, single buffered']
    %6 = vsyncpa [#allocation3], 0
    %7 = vsyncpa [#allocation4], 0
    // Predicated region
    $region2: #{tpu_custom_call.1} parent=1 // pred_check
      _
    $region3: #{tpu_custom_call.1} parent=1 // pred_check_branch
      %9 = sbr.rel (0) target = $region5
    $region4: #{tpu_custom_call.1} parent=1 // pred_region
      %11 = vsyncadd [#allocation3], 0
      %s13 = sshll.u32 %s0, 4
      %s14 = int_to_ptr.hbm [resolvable:$true] %s13
      %s15 = sshll.u32 [#allocation2], 4
      %s16 = int_to_ptr.vmem [resolvable:$true] %s15
      %18 = dma.hbm_to_vmem [thread:$0]  %s14, 128, %s16, [#allocation3]
    $region5: #{tpu_custom_call.1} parent=1 // pred_fallthru
      _
    // Predicated region
    $region6: #{tpu_custom_call.1} parent=1 // pred_check
      _
    $region7: #{tpu_custom_call.1} parent=1 // pred_check_branch
      %20 = sbr.rel (0) target = $region9
    $region8: #{tpu_custom_call.1} parent=1 // pred_region
      %22 = dma.done [#allocation3], 128
    $region9: #{tpu_custom_call.1} parent=1 // pred_fallthru
      _
    %v23 = vld [vmem:[#allocation2] sm:$0xff]
    %v24 = vxor.u32 %v23, 2147483648
    %v25 = vmul.f32 %v24, 1.442695
    %v26 = vpow.pop %v25
    %v27 = vadd.f32 %v26, 1.0
    %v28 = vrcp.pop %v27
    %v29 = vmul.f32 %v27, %v28
    %v30 = vsub.f32 1.0, %v29
    %v31 = vmul.f32 %v28, %v30
    %v32 = vadd.f32 %v28, %v31
    %vm33 = vweird.f32 %v27
    %vm34 = vweird.f32 %v28
    %vm35 = vmor %vm33, %vm34
    %v36 = vsel %vm35, %v28, %v32
    %v37 = vand.u32 2147483647, %v27
    %vm38 = vcmp.eq.f32.partialorder %v37, 8.507059e+37
    %v39 = vand.u32 %v27, 2147483648
    %v40 = vor.u32 1.1754944e-38, %v39
    %v41 = vsel %vm38, %v40, %v36
    %v42 = vmul.f32 1.0, %v41
    %44 = vst [vmem:[#allocation1] ss:$2 sm:$0xff] %v23
    %v45 = vld.sshfl [vmem:[#allocation1] sm:$0xff pattern:$0x75316420]
    %v46 = vld.sshfl [vmem:[#allocation1 + $0x8] sm:$0xff pattern:$0x75316420]
    %vm49 = vcmask 1043456
    %v50 = vsel %vm49, %v45, -inf
    %v51 = vsel %vm49, %v46, -inf
    %v52 = vmax.f32 %v50, %v51
    %53 = vmax.xlane.f32.xlu0 %v52
    %v54 = vpop.xlane.xlu0 %53
    %v57 = vunpack.c.l.s4 839922192
    %v58 = vunpack.c.0.s8 %v57
    %v59 = vperm.slane %v54, %v58
    %v61 = vsub.f32 %v23, %v59
    %v62 = vmul.f32 %v61, 1.442695
    %v63 = vpow.pop %v62
    %65 = vst [vmem:[#allocation1] ss:$2 sm:$0xff] %v63
    %v66 = vld.sshfl [vmem:[#allocation1] sm:$0xff pattern:$0x75316420]
    %v67 = vld.sshfl [vmem:[#allocation1 + $0x8] sm:$0xff pattern:$0x75316420]
    %v70 = vsel %vm49, %v66, 0.0
    %v71 = vsel %vm49, %v67, 0.0
    %v72 = vadd.f32 %v70, %v71
    %73 = vadd.xlane.f32.xlu0 %v72
    %v74 = vpop.xlane.xlu0 %73
    %v77 = vunpack.c.l.s4 839922192
    %v78 = vunpack.c.0.s8 %v77
    %v79 = vperm.slane %v74, %v78
    %v81 = vrcp.pop %v79
    %v82 = vmul.f32 %v79, %v81
    %v83 = vsub.f32 1.0, %v82
    %v84 = vmul.f32 %v81, %v83
    %v85 = vadd.f32 %v81, %v84
    %vm86 = vweird.f32 %v79
    %vm87 = vweird.f32 %v81
    %vm88 = vmor %vm86, %vm87
    %v89 = vsel %vm88, %v81, %v85
    %v90 = vand.u32 2147483647, %v79
    %vm91 = vcmp.eq.f32.partialorder %v90, 8.507059e+37
    %v92 = vand.u32 %v79, 2147483648
    %v93 = vor.u32 1.1754944e-38, %v92
    %v94 = vsel %vm91, %v93, %v89
    %v95 = vmul.f32 %v63, %v94
    %v96 = vlaneseq
    %v97 = vshrl.u32 %v96, 7
    %vm98 = vcmp.lt.s32.totalorder %v97, 0
    %v99 = vsub.s32 0, %v97
    %v100 = vsel %vm98, %v99, %v97
    %v101 = vshrl.u32 %v100, 1
    %v102 = vand.u32 %v100, 1
    %v103 = vsub.s32 0, %v102
    %v104 = vsel %vm98, %v103, %v102
    %vm105 = vcmp.ne.s32.totalorder %v104, 0
    %vm106 = vcmp.lt.s32.totalorder %v104, 0
    %vm107 = vmand %vm106, %vm105
    %v108 = vadd.s32 %v104, 2
    %v109 = vsel %vm107, %v108, %v104
    %vm110 = vcmp.eq.s32.totalorder %v109, 0
    %v111 = vsel %vm110, 1, 0
    %vm112 = vcmp.eq.s32.totalorder %v111, 1
    %114 = vst [vmem:[#allocation1] ss:$2 sm:$0xff] %v42
    %v115 = vld.sshfl [vmem:[#allocation1] sm:$0xff pattern:$0x75316420]
    %v116 = vld.sshfl [vmem:[#allocation1 + $0x8] sm:$0xff pattern:$0x75316420]
    %120 = vst [vmem:[#allocation1] ss:$2 sm:$0xff] %v95
    %v121 = vld.sshfl [vmem:[#allocation1] sm:$0xff pattern:$0x75316420]
    %v122 = vld.sshfl [vmem:[#allocation1 + $0x8] sm:$0xff pattern:$0x75316420]
    %v125 = vsel %vm112, %v115, %v121
    %v126 = vsel %vm112, %v116, %v122
    %v129 = vrot.slane %v126, 4
    %v130 = vsel %vm49, %v125, %v129
    %132 = vst [vmem:[#allocation5] sm:$0xff] %v130
    // Predicated region
    $region10: #{tpu_custom_call.1} parent=1 // pred_check
      _
    $region11: #{tpu_custom_call.1} parent=1 // pred_check_branch
      %134 = sbr.rel (0) target = $region13
    $region12: #{tpu_custom_call.1} parent=1 // pred_region
      %136 = vsyncadd [#allocation4], 0
      %s138 = sshll.u32 [#allocation5], 4
      %s139 = int_to_ptr.vmem [resolvable:$true] %s138
      %s140 = sshll.u32 %s1, 4
      %s141 = int_to_ptr.hbm [resolvable:$true] %s140
      %143 = dma.vmem_to_hbm [thread:$0]  %s139, 128, %s141, [#allocation4]
    $region13: #{tpu_custom_call.1} parent=1 // pred_fallthru
      _
    // Predicated region
    $region14: #{tpu_custom_call.1} parent=1 // pred_check
      _
    $region15: #{tpu_custom_call.1} parent=1 // pred_check_branch
      %145 = sbr.rel (0) target = $region17
    $region16: #{tpu_custom_call.1} parent=1 // pred_region
      %147 = dma.done [#allocation4], 128
    $region17: #{tpu_custom_call.1} parent=1 // pred_fallthru
      _
    %148 = vsyncpa [#allocation3], 1
    %149 = vsyncpa [#allocation4], 1

</llo_original>
